<compile_context>
chip_gen: v5e
topology: v5e:2x2
jax: 0.10.0
libtpu: 0.0.40
codegen_flags: <defaults>
</compile_context>

<pallas_src>
import functools

import jax
import jax.numpy as jnp
from jax.experimental import pallas as pl
from jax.experimental.pallas import tpu as pltpu


def _round_up(n, m):
    return ((n + m - 1) // m) * m


# ---------------------------------------------------------------------------
# Kernel: the whole 3-layer MLP on one (TILE_B, ·) batch tile.
# ---------------------------------------------------------------------------
def _mlp_kernel(x_ref, w1_ref, b1_ref, w2_ref, b2_ref, w3_ref, b3_ref, o_ref):
    # x arrives f32 straight from the caller's buffer (no host-side cast pass);
    # cast to bf16 here — the kernel is HBM/overhead bound, VPU has slack.
    x = x_ref[...].astype(jnp.bfloat16)

    # fc1 + ReLU  (bf16 MXU matmul, f32 accumulate, f32 epilogue)
    h1 = jnp.dot(x, w1_ref[...], preferred_element_type=jnp.float32)
    h1 = jnp.maximum(h1 + b1_ref[...], 0.0)

    # fc2 + ReLU
    h2 = jnp.dot(h1.astype(jnp.bfloat16), w2_ref[...],
                 preferred_element_type=jnp.float32)
    h2 = jnp.maximum(h2 + b2_ref[...], 0.0)

    # fc3 (no activation, matches forward()).  Store in o_ref.dtype (bf16 by
    # default) — halves the dominant HBM writeback stream; lane dim is a dense
    # multiple of 128 so the store is an unmasked vst.
    out = jnp.dot(h2.astype(jnp.bfloat16), w3_ref[...],
                  preferred_element_type=jnp.float32)
    o_ref[...] = (out + b3_ref[...]).astype(o_ref.dtype)


# ---------------------------------------------------------------------------
# One-time parameter prep: transpose to (in, out), pad every *output/hidden*
# feature dim to a multiple of 128 (zero padding is numerically inert through
# ReLU and the following matmul), cast weights to bf16.  The K dim of fc1 is
# kept at the true input_size so x never needs a lane pad.
# ---------------------------------------------------------------------------
def prepare_params(params):
    hid, in_dim = params["w1"].shape
    out_dim = params["w3"].shape[0]
    hid_p = _round_up(hid, 128)
    out_p = _round_up(out_dim, 128)

    w1 = jnp.pad(params["w1"].T, ((0, 0), (0, hid_p - hid))).astype(jnp.bfloat16)
    w2 = jnp.pad(params["w2"].T, ((0, hid_p - hid), (0, hid_p - hid))).astype(jnp.bfloat16)
    w3 = jnp.pad(params["w3"].T, ((0, hid_p - hid), (0, out_p - out_dim))).astype(jnp.bfloat16)
    b1 = jnp.pad(params["b1"].astype(jnp.float32), (0, hid_p - hid))[None, :]
    b2 = jnp.pad(params["b2"].astype(jnp.float32), (0, hid_p - hid))[None, :]
    b3 = jnp.pad(params["b3"].astype(jnp.float32), (0, out_p - out_dim))[None, :]

    return {
        "w1": w1, "b1": b1, "w2": w2, "b2": b2, "w3": w3, "b3": b3,
        "in_dim": in_dim, "out_dim": out_dim,
        "hid_p": hid_p, "out_p": out_p,
    }


def _pick_tile(batch, tb):
    """Batch tile: multiple of 16 rows (bf16 sublane packing), as large as
    possible (per-grid-step overhead ~0.35us), but split into >= 2 grid steps
    whenever the batch allows it so v7x's two TensorCores both get work."""
    b16 = _round_up(batch, 16)
    if b16 <= 16:
        return 16, 16
    tile = min(tb, _round_up(pl.cdiv(b16, 2), 16))
    return tile, _round_up(b16, tile)


@functools.partial(jax.jit, static_argnames=("out_dim", "tb", "out_dtype"))
def _forward(x, w1, b1, w2, b2, w3, b3, *, out_dim, tb, out_dtype):
    batch, in_dim = x.shape
    out_p = w3.shape[1]
    tile_b, batch_p = _pick_tile(batch, tb)

    # Only the batch axis ever needs padding (the lane axis of x is used at its
    # true extent); pad + final slice live inside this jit so they share the
    # dispatch with the pallas_call.
    x_p = x if batch_p == batch else jnp.pad(x, ((0, batch_p - batch), (0, 0)))

    def resident(shape):
        # Constant index map -> block never changes -> Pallas keeps these tiny
        # (~100 KB total) weights/biases resident in VMEM across the grid.
        return pl.BlockSpec(shape, lambda i: (0,) * len(shape))

    out = pl.pallas_call(
        _mlp_kernel,
        out_shape=jax.ShapeDtypeStruct((batch_p, out_p), out_dtype),
        grid=(batch_p // tile_b,),
        in_specs=[
            pl.BlockSpec((tile_b, in_dim), lambda i: (i, 0)),   # x: tiled over batch
            resident(w1.shape), resident(b1.shape),
            resident(w2.shape), resident(b2.shape),
            resident(w3.shape), resident(b3.shape),
        ],
        out_specs=pl.BlockSpec((tile_b, out_p), lambda i: (i, 0)),
        compiler_params=pltpu.CompilerParams(
            dimension_semantics=("parallel",),   # batch tiles are independent
        ),
    )(x_p, w1, b1, w2, b2, w3, b3)

    return out[:batch, :out_dim]


def chatbot_forward(x, prep, *, tb=2048, out_dtype=jnp.bfloat16):
    """x: (B, input_size) float32.  prep: output of prepare_params()."""
    assert x.shape[1] == prep["in_dim"]
    return _forward(x, prep["w1"], prep["b1"], prep["w2"], prep["b2"],
                    prep["w3"], prep["b3"],
                    out_dim=prep["out_dim"], tb=tb, out_dtype=out_dtype)


def init_params(key, input_size, hidden_size, output_size):
    """Deterministic synthetic init (nn.Linear-style uniform ranges), PyTorch layout."""
    ks = jax.random.split(key, 6)

    def lin(kw, kb, fan_in, fan_out):
        bound = 1.0 / jnp.sqrt(fan_in)
        w = jax.random.uniform(kw, (fan_out, fan_in), jnp.float32, -bound, bound)
        b = jax.random.uniform(kb, (fan_out,), jnp.float32, -bound, bound)
        return w, b

    w1, b1 = lin(ks[0], ks[1], input_size, hidden_size)
    w2, b2 = lin(ks[2], ks[3], hidden_size, hidden_size)
    w3, b3 = lin(ks[4], ks[5], hidden_size, output_size)
    return {"w1": w1, "b1": b1, "w2": w2, "b2": b2, "w3": w3, "b3": b3}


def _reference(x, params):
    h1 = jnp.maximum(x @ params["w1"].T + params["b1"], 0.0)
    h2 = jnp.maximum(h1 @ params["w2"].T + params["b2"], 0.0)
    return h2 @ params["w3"].T + params["b3"]


if __name__ == "__main__":
    # Synthetic sizes: input_size = len(words), output_size = len(tags) in the
    # original (data-derived); hidden_size = 16 as in chatbot.py.
    input_size, hidden_size, output_size = 32, 16, 8

    key = jax.random.PRNGKey(0)
    kx, kx2, kp = jax.random.split(key, 3)
    params = init_params(kp, input_size, hidden_size, output_size)
    prep = prepare_params(params)  # one-time transpose / pad / bf16 cast

    # --- small batch (single grid step, batch padded 8 -> 16) ---------------
    x = jax.random.uniform(kx, (8, input_size), jnp.float32)
    out = jax.block_until_ready(chatbot_forward(x, prep))
    ref = _reference(x, params)
    assert out.shape == ref.shape, "shape mismatch vs reference"
    assert jnp.allclose(out.astype(jnp.float32), ref, atol=5e-2, rtol=5e-2), \
        "mismatch vs reference (small batch)"

    # --- larger batch exercising the multi-step grid (>=2 tiles) path -------
    x2 = jax.random.uniform(kx2, (40, input_size), jnp.float32)
    out2 = jax.block_until_ready(chatbot_forward(x2, prep))
    ref2 = _reference(x2, params)
    assert out2.shape == ref2.shape, "shape mismatch vs reference (grid path)"
    assert jnp.allclose(out2.astype(jnp.float32), ref2, atol=5e-2, rtol=5e-2), \
        "mismatch vs reference (grid path)"

    print("KERNEL_OK")
</pallas_src>

<mosaic_0001>
module attributes {stable_mosaic.version = 11 : i64} {
  func.func @_mlp_kernel(%arg0: i32, %arg1: memref<16x32xf32, #tpu.memory_space<vmem>>, %arg2: memref<32x128xbf16, #tpu.memory_space<vmem>>, %arg3: memref<1x128xf32, #tpu.memory_space<vmem>>, %arg4: memref<128x128xbf16, #tpu.memory_space<vmem>>, %arg5: memref<1x128xf32, #tpu.memory_space<vmem>>, %arg6: memref<128x128xbf16, #tpu.memory_space<vmem>>, %arg7: memref<1x128xf32, #tpu.memory_space<vmem>>, %arg8: memref<16x128xbf16, #tpu.memory_space<vmem>>) attributes {dimension_semantics = [#tpu.dimension_semantics<parallel>], iteration_bounds = array<i64: 1>, scalar_prefetch = 0 : i64, scratch_operands = 0 : i64, tpu.core_type = #tpu.core_type<tc>, window_params = [{transform_indices = @transform_0, window_bounds = array<i64: 16, 32>}, {pipeline_mode = #tpu.pipeline_mode<synchronous>, transform_indices = @transform_1, window_bounds = array<i64: 32, 128>}, {pipeline_mode = #tpu.pipeline_mode<synchronous>, transform_indices = @transform_2, window_bounds = array<i64: 1, 128>}, {pipeline_mode = #tpu.pipeline_mode<synchronous>, transform_indices = @transform_3, window_bounds = array<i64: 128, 128>}, {pipeline_mode = #tpu.pipeline_mode<synchronous>, transform_indices = @transform_4, window_bounds = array<i64: 1, 128>}, {pipeline_mode = #tpu.pipeline_mode<synchronous>, transform_indices = @transform_5, window_bounds = array<i64: 128, 128>}, {pipeline_mode = #tpu.pipeline_mode<synchronous>, transform_indices = @transform_6, window_bounds = array<i64: 1, 128>}, {transform_indices = @transform_7, window_bounds = array<i64: 16, 128>}]} {
    %c0 = arith.constant 0 : index
    %c0_0 = arith.constant 0 : index
    %0 = vector.load %arg1[%c0, %c0_0] : memref<16x32xf32, #tpu.memory_space<vmem>>, vector<16x32xf32>
    %1 = arith.truncf %0 : vector<16x32xf32> to vector<16x32xbf16>
    %c0_1 = arith.constant 0 : index
    %c0_2 = arith.constant 0 : index
    %2 = vector.load %arg2[%c0_1, %c0_2] : memref<32x128xbf16, #tpu.memory_space<vmem>>, vector<32x128xbf16>
    %cst = arith.constant dense<0.000000e+00> : vector<16x128xf32>
    %3 = tpu.matmul %1, %2, %cst {dimension_numbers = #tpu.dot_dimension_numbers<[1], [0], [0], [1], [0, 0, 1, 1], [], []>} : vector<16x32xbf16>, vector<32x128xbf16>, vector<16x128xf32> -> vector<16x128xf32>
    %c0_3 = arith.constant 0 : index
    %c0_4 = arith.constant 0 : index
    %4 = vector.load %arg3[%c0_3, %c0_4] : memref<1x128xf32, #tpu.memory_space<vmem>>, vector<1x128xf32>
    %5 = vector.broadcast %4 : vector<1x128xf32> to vector<16x128xf32>
    %6 = arith.addf %3, %5 : vector<16x128xf32>
    %cst_5 = arith.constant 0.000000e+00 : f32
    %7 = vector.broadcast %cst_5 : f32 to vector<16x128xf32>
    %8 = arith.maximumf %6, %7 : vector<16x128xf32>
    %9 = arith.truncf %8 : vector<16x128xf32> to vector<16x128xbf16>
    %c0_6 = arith.constant 0 : index
    %c0_7 = arith.constant 0 : index
    %10 = vector.load %arg4[%c0_6, %c0_7] : memref<128x128xbf16, #tpu.memory_space<vmem>>, vector<128x128xbf16>
    %cst_8 = arith.constant dense<0.000000e+00> : vector<16x128xf32>
    %11 = tpu.matmul %9, %10, %cst_8 {dimension_numbers = #tpu.dot_dimension_numbers<[1], [0], [0], [1], [0, 0, 1, 1], [], []>} : vector<16x128xbf16>, vector<128x128xbf16>, vector<16x128xf32> -> vector<16x128xf32>
    %c0_9 = arith.constant 0 : index
    %c0_10 = arith.constant 0 : index
    %12 = vector.load %arg5[%c0_9, %c0_10] : memref<1x128xf32, #tpu.memory_space<vmem>>, vector<1x128xf32>
    %13 = vector.broadcast %12 : vector<1x128xf32> to vector<16x128xf32>
    %14 = arith.addf %11, %13 : vector<16x128xf32>
    %cst_11 = arith.constant 0.000000e+00 : f32
    %15 = vector.broadcast %cst_11 : f32 to vector<16x128xf32>
    %16 = arith.maximumf %14, %15 : vector<16x128xf32>
    %17 = arith.truncf %16 : vector<16x128xf32> to vector<16x128xbf16>
    %c0_12 = arith.constant 0 : index
    %c0_13 = arith.constant 0 : index
    %18 = vector.load %arg6[%c0_12, %c0_13] : memref<128x128xbf16, #tpu.memory_space<vmem>>, vector<128x128xbf16>
    %cst_14 = arith.constant dense<0.000000e+00> : vector<16x128xf32>
    %19 = tpu.matmul %17, %18, %cst_14 {dimension_numbers = #tpu.dot_dimension_numbers<[1], [0], [0], [1], [0, 0, 1, 1], [], []>} : vector<16x128xbf16>, vector<128x128xbf16>, vector<16x128xf32> -> vector<16x128xf32>
    %c0_15 = arith.constant 0 : index
    %c0_16 = arith.constant 0 : index
    %20 = vector.load %arg7[%c0_15, %c0_16] : memref<1x128xf32, #tpu.memory_space<vmem>>, vector<1x128xf32>
    %21 = vector.broadcast %20 : vector<1x128xf32> to vector<16x128xf32>
    %22 = arith.addf %19, %21 : vector<16x128xf32>
    %23 = arith.truncf %22 : vector<16x128xf32> to vector<16x128xbf16>
    %c0_17 = arith.constant 0 : index
    %c0_18 = arith.constant 0 : index
    %24 = vector.load %arg8[%c0_17, %c0_18] : memref<16x128xbf16, #tpu.memory_space<vmem>>, vector<16x128xbf16>
    tpu.vector_store %arg8[%c0_17, %c0_18], %23 {strides = array<i32>} : memref<16x128xbf16, #tpu.memory_space<vmem>>, vector<16x128xbf16>,
    return
  }
  func.func @transform_0(%arg0: i32) -> (i32, i32) {
    %c0_i32 = arith.constant 0 : i32
    %c0_i32_0 = arith.constant 0 : i32
    return %arg0, %c0_i32 : i32, i32
  }
  func.func @transform_1(%arg0: i32) -> (i32, i32) {
    %c0_i32 = arith.constant 0 : i32
    %c0_i32_0 = arith.constant 0 : i32
    %c0_i32_1 = arith.constant 0 : i32
    return %c0_i32, %c0_i32_0 : i32, i32
  }
  func.func @transform_2(%arg0: i32) -> (i32, i32) {
    %c0_i32 = arith.constant 0 : i32
    %c0_i32_0 = arith.constant 0 : i32
    %c0_i32_1 = arith.constant 0 : i32
    return %c0_i32, %c0_i32_0 : i32, i32
  }
  func.func @transform_3(%arg0: i32) -> (i32, i32) {
    %c0_i32 = arith.constant 0 : i32
    %c0_i32_0 = arith.constant 0 : i32
    %c0_i32_1 = arith.constant 0 : i32
    return %c0_i32, %c0_i32_0 : i32, i32
  }
  func.func @transform_4(%arg0: i32) -> (i32, i32) {
    %c0_i32 = arith.constant 0 : i32
    %c0_i32_0 = arith.constant 0 : i32
    %c0_i32_1 = arith.constant 0 : i32
    return %c0_i32, %c0_i32_0 : i32, i32
  }
  func.func @transform_5(%arg0: i32) -> (i32, i32) {
    %c0_i32 = arith.constant 0 : i32
    %c0_i32_0 = arith.constant 0 : i32
    %c0_i32_1 = arith.constant 0 : i32
    return %c0_i32, %c0_i32_0 : i32, i32
  }
  func.func @transform_6(%arg0: i32) -> (i32, i32) {
    %c0_i32 = arith.constant 0 : i32
    %c0_i32_0 = arith.constant 0 : i32
    %c0_i32_1 = arith.constant 0 : i32
    return %c0_i32, %c0_i32_0 : i32, i32
  }
  func.func @transform_7(%arg0: i32) -> (i32, i32) {
    %c0_i32 = arith.constant 0 : i32
    %c0_i32_0 = arith.constant 0 : i32
    return %arg0, %c0_i32 : i32, i32
  }
}

</mosaic_0001>

<llo_original>
// kernel: _forward.1
$region0: #{_forward.1}
  #allocation0 [shape = 'u32[]', space=smem, size = 0x4, offset = 0x4, fixed_abs, tag = 'smem constant byte address 0x4 - core index']
  #allocation1 [shape = 'u32[72,128]{1,0:T(1,128)}', space=vmem, size = 0x9000, scoped, tag = 'internal scratch']
  %s0 = inlined_call_operand.vmem [shape: f32[16,32], index: 0, kind: input, shape index: {}]
  %s1 = inlined_call_operand.vmem [shape: bf16[32,128], index: 1, kind: input, shape index: {}]
  %s2 = inlined_call_operand.vmem [shape: f32[1,128], index: 2, kind: input, shape index: {}]
  %s3 = inlined_call_operand.hbm [shape: bf16[128,128], index: 3, kind: input, shape index: {}]
  %s4 = inlined_call_operand.vmem [shape: f32[1,128], index: 4, kind: input, shape index: {}]
  %s5 = inlined_call_operand.hbm [shape: bf16[128,128], index: 5, kind: input, shape index: {}]
  %s6 = inlined_call_operand.vmem [shape: f32[1,128], index: 6, kind: input, shape index: {}]
  %s7 = inlined_call_operand.vmem [shape: bf16[16,128], index: 7, kind: output, shape index: {}]
  %s8 = sld [smem:[#allocation0]]
  $region46: #{_forward.1} parent=0
    _
  %s10 = ssub.s32 1, %s8
  %s11 = scalar_select 0, %s10, %s8
  $region1: #{_forward.1} parent=0
    #allocation2 [shape = 'u8[32768]{0}', space=vmem, size = 0x8000, scoped, tag = 'input window, operand 3, single buffered']
    #allocation3 [shape = 's32[1]{0}', space=sflag, size = 0x4, scoped, tag = 'scoped memory for _forward.1']
    #allocation4 [shape = 'u8[32768]{0}', space=vmem, size = 0x8000, scoped, tag = 'input window, operand 5, single buffered']
    #allocation5 [shape = 's32[1]{0}', space=sflag, size = 0x4, scoped, tag = 'scoped memory for _forward.1']
    %12 = vsyncpa [#allocation3], 0
    %13 = vsyncpa [#allocation5], 0
    // Predicated region
    $region2: #{_forward.1} parent=1 // pred_check
      _
    $region3: #{_forward.1} parent=1 // pred_check_branch
      %15 = sbr.rel (0) target = $region5
    $region4: #{_forward.1} parent=1 // pred_region
      _
    $region5: #{_forward.1} parent=1 // pred_fallthru
      _
    // Predicated region
    $region6: #{_forward.1} parent=1 // pred_check
      _
    $region7: #{_forward.1} parent=1 // pred_check_branch
      %17 = sbr.rel (0) target = $region9
    $region8: #{_forward.1} parent=1 // pred_region
      _
    $region9: #{_forward.1} parent=1 // pred_fallthru
      _
    // Predicated region
    $region10: #{_forward.1} parent=1 // pred_check
      _
    $region11: #{_forward.1} parent=1 // pred_check_branch
      %19 = sbr.rel (0) target = $region13
    $region12: #{_forward.1} parent=1 // pred_region
      _
    $region13: #{_forward.1} parent=1 // pred_fallthru
      _
    // Predicated region
    $region14: #{_forward.1} parent=1 // pred_check
      _
    $region15: #{_forward.1} parent=1 // pred_check_branch
      %21 = sbr.rel (0) target = $region17
    $region16: #{_forward.1} parent=1 // pred_region
      %23 = vsyncadd [#allocation3], 0
      %s24 = sshll.u32 %s3, 4
      %s25 = int_to_ptr.hbm [resolvable:$true] %s24
      %s26 = sshll.u32 [#allocation2], 4
      %s27 = int_to_ptr.vmem [resolvable:$true] %s26
      %32 = dma.hbm_to_vmem [thread:$0]  %s25, 1024, %s27, [#allocation3], 64, 64, 4
    $region17: #{_forward.1} parent=1 // pred_fallthru
      _
    // Predicated region
    $region18: #{_forward.1} parent=1 // pred_check
      _
    $region19: #{_forward.1} parent=1 // pred_check_branch
      %34 = sbr.rel (0) target = $region21
    $region20: #{_forward.1} parent=1 // pred_region
      _
    $region21: #{_forward.1} parent=1 // pred_fallthru
      _
    // Predicated region
    $region22: #{_forward.1} parent=1 // pred_check
      _
    $region23: #{_forward.1} parent=1 // pred_check_branch
      %36 = sbr.rel (0) target = $region25
    $region24: #{_forward.1} parent=1 // pred_region
      %38 = vsyncadd [#allocation5], 0
      %s39 = sshll.u32 %s5, 4
      %s40 = int_to_ptr.hbm [resolvable:$true] %s39
      %s41 = sshll.u32 [#allocation4], 4
      %s42 = int_to_ptr.vmem [resolvable:$true] %s41
      %47 = dma.hbm_to_vmem [thread:$0]  %s40, 1024, %s42, [#allocation5], 64, 64, 4
    $region25: #{_forward.1} parent=1 // pred_fallthru
      _
    // Predicated region
    $region26: #{_forward.1} parent=1 // pred_check
      _
    $region27: #{_forward.1} parent=1 // pred_check_branch
      %49 = sbr.rel (0) target = $region29
    $region28: #{_forward.1} parent=1 // pred_region
      _
    $region29: #{_forward.1} parent=1 // pred_fallthru
      _
    // Predicated region
    $region30: #{_forward.1} parent=1 // pred_check
      _
    $region31: #{_forward.1} parent=1 // pred_check_branch
      %51 = sbr.rel (0) target = $region33
    $region32: #{_forward.1} parent=1 // pred_region
      %53 = dma.done [#allocation3], 1024
    $region33: #{_forward.1} parent=1 // pred_fallthru
      _
    // Predicated region
    $region34: #{_forward.1} parent=1 // pred_check
      _
    $region35: #{_forward.1} parent=1 // pred_check_branch
      %55 = sbr.rel (0) target = $region37
    $region36: #{_forward.1} parent=1 // pred_region
      %57 = dma.done [#allocation5], 1024
    $region37: #{_forward.1} parent=1 // pred_fallthru
      _
    %v59 = vld [vmem:[%s0] sm:$0xff]
    %v60 = vld [vmem:[%s0 + $0x8] sm:$0xff]
    %v61 = vpack.c.bf16 %v60, %v59
    %v62 = vld [vmem:[%s1] sm:$0xf]
    %v63 = vld [vmem:[%s1 + $0x4] sm:$0xf]
    %v64 = vld [vmem:[%s1 + $0x8] sm:$0xf]
    %v65 = vld [vmem:[%s1 + $0xc] sm:$0xf]
    %v66 = vld [vmem:[%s2] sm:$0x1]
    %v68 = vperm.slane %v66, 0
    %v74 = vunpack.c.l.b16 %v62
    %v75 = vunpack.c.l.b16 %v63
    %v76 = vunpack.c.l.b16 %v64
    %v77 = vunpack.c.l.b16 %v65
    %v78 = vpack.c.b16 %v75, %v74
    %v79 = vpack.c.b16 %v77, %v76
    %vm82 = vcmask 261120
    %v84 = vsel %vm82, %v61, 0
    %86 = vmatpush.bf16.msra.mxu0 0
    %87 = vmatpush.bf16.msra.mxu0 0
    %88 = vmatpush.bf16.msra.mxu0 0
    %89 = vmatpush.bf16.msra.mxu0 0
    %90 = vmatpush.bf16.msra.mxu0 0
    %91 = vmatpush.bf16.msra.mxu0 0
    %92 = vmatpush.bf16.msra.mxu0 %v79
    %93 = vmatpush.bf16.msra.mxu0 %v78
    %94 = vmatmul.bf16.gmra.mxu0 %v84
    %v95 = vpop.f32.mrf.mxu0
    %v96 = vadd.f32 %v68, %v95
    %v97 = vpop.f32.mrf.mxu0
    %v98 = vadd.f32 %v68, %v97
    %99 = vdwg.mxu0
    %v100 = vmax.f32 %v96, 0.0
    %v101 = vmax.f32 %v98, 0.0
    %v102 = vpack.c.bf16 %v101, %v100
    %v103 = vld [vmem:[#allocation2] sm:$0xf]
    %v104 = vld [vmem:[#allocation2 + $0x4] sm:$0xf]
    %v105 = vld [vmem:[#allocation2 + $0x8] sm:$0xf]
    %v106 = vld [vmem:[#allocation2 + $0xc] sm:$0xf]
    %v107 = vld [vmem:[#allocation2 + $0x10] sm:$0xf]
    %v108 = vld [vmem:[#allocation2 + $0x14] sm:$0xf]
    %v109 = vld [vmem:[#allocation2 + $0x18] sm:$0xf]
    %v110 = vld [vmem:[#allocation2 + $0x1c] sm:$0xf]
    %v111 = vld [vmem:[#allocation2 + $0x20] sm:$0xf]
    %v112 = vld [vmem:[#allocation2 + $0x24] sm:$0xf]
    %v113 = vld [vmem:[#allocation2 + $0x28] sm:$0xf]
    %v114 = vld [vmem:[#allocation2 + $0x2c] sm:$0xf]
    %v115 = vld [vmem:[#allocation2 + $0x30] sm:$0xf]
    %v116 = vld [vmem:[#allocation2 + $0x34] sm:$0xf]
    %v117 = vld [vmem:[#allocation2 + $0x38] sm:$0xf]
    %v118 = vld [vmem:[#allocation2 + $0x3c] sm:$0xf]
    %v119 = vld [vmem:[%s4] sm:$0x1]
    %v121 = vperm.slane %v119, 0
    %v139 = vunpack.c.l.b16 %v103
    %v140 = vunpack.c.l.b16 %v104
    %v141 = vunpack.c.l.b16 %v105
    %v142 = vunpack.c.l.b16 %v106
    %v143 = vunpack.c.l.b16 %v107
    %v144 = vunpack.c.l.b16 %v108
    %v145 = vunpack.c.l.b16 %v109
    %v146 = vunpack.c.l.b16 %v110
    %v147 = vunpack.c.l.b16 %v111
    %v148 = vunpack.c.l.b16 %v112
    %v149 = vunpack.c.l.b16 %v113
    %v150 = vunpack.c.l.b16 %v114
    %v151 = vunpack.c.l.b16 %v115
    %v152 = vunpack.c.l.b16 %v116
    %v153 = vunpack.c.l.b16 %v117
    %v154 = vunpack.c.l.b16 %v118
    %v155 = vpack.c.b16 %v140, %v139
    %v156 = vpack.c.b16 %v142, %v141
    %v157 = vpack.c.b16 %v144, %v143
    %v158 = vpack.c.b16 %v146, %v145
    %v159 = vpack.c.b16 %v148, %v147
    %v160 = vpack.c.b16 %v150, %v149
    %v161 = vpack.c.b16 %v152, %v151
    %v162 = vpack.c.b16 %v154, %v153
    %171 = vmatpush.bf16.msra.mxu0 %v162
    %172 = vmatpush.bf16.msra.mxu0 %v161
    %173 = vmatpush.bf16.msra.mxu0 %v160
    %174 = vmatpush.bf16.msra.mxu0 %v159
    %175 = vmatpush.bf16.msra.mxu0 %v158
    %176 = vmatpush.bf16.msra.mxu0 %v157
    %177 = vmatpush.bf16.msra.mxu0 %v156
    %178 = vmatpush.bf16.msra.mxu0 %v155
    %179 = vmatmul.bf16.gmra.mxu0 %v102
    %v180 = vpop.f32.mrf.mxu0
    %v181 = vadd.f32 %v121, %v180
    %v182 = vpop.f32.mrf.mxu0
    %v183 = vadd.f32 %v121, %v182
    %184 = vdwg.mxu0
    %v185 = vmax.f32 %v181, 0.0
    %v186 = vmax.f32 %v183, 0.0
    %v187 = vpack.c.bf16 %v186, %v185
    %v188 = vld [vmem:[#allocation4] sm:$0xf]
    %v189 = vld [vmem:[#allocation4 + $0x4] sm:$0xf]
    %v190 = vld [vmem:[#allocation4 + $0x8] sm:$0xf]
    %v191 = vld [vmem:[#allocation4 + $0xc] sm:$0xf]
    %v192 = vld [vmem:[#allocation4 + $0x10] sm:$0xf]
    %v193 = vld [vmem:[#allocation4 + $0x14] sm:$0xf]
    %v194 = vld [vmem:[#allocation4 + $0x18] sm:$0xf]
    %v195 = vld [vmem:[#allocation4 + $0x1c] sm:$0xf]
    %v196 = vld [vmem:[#allocation4 + $0x20] sm:$0xf]
    %v197 = vld [vmem:[#allocation4 + $0x24] sm:$0xf]
    %v198 = vld [vmem:[#allocation4 + $0x28] sm:$0xf]
    %v199 = vld [vmem:[#allocation4 + $0x2c] sm:$0xf]
    %v200 = vld [vmem:[#allocation4 + $0x30] sm:$0xf]
    %v201 = vld [vmem:[#allocation4 + $0x34] sm:$0xf]
    %v202 = vld [vmem:[#allocation4 + $0x38] sm:$0xf]
    %v203 = vld [vmem:[#allocation4 + $0x3c] sm:$0xf]
    %v204 = vld [vmem:[%s6] sm:$0x1]
    %v206 = vperm.slane %v204, 0
    %v224 = vunpack.c.l.b16 %v188
    %v225 = vunpack.c.l.b16 %v189
    %v226 = vunpack.c.l.b16 %v190
    %v227 = vunpack.c.l.b16 %v191
    %v228 = vunpack.c.l.b16 %v192
    %v229 = vunpack.c.l.b16 %v193
    %v230 = vunpack.c.l.b16 %v194
    %v231 = vunpack.c.l.b16 %v195
    %v232 = vunpack.c.l.b16 %v196
    %v233 = vunpack.c.l.b16 %v197
    %v234 = vunpack.c.l.b16 %v198
    %v235 = vunpack.c.l.b16 %v199
    %v236 = vunpack.c.l.b16 %v200
    %v237 = vunpack.c.l.b16 %v201
    %v238 = vunpack.c.l.b16 %v202
    %v239 = vunpack.c.l.b16 %v203
    %v240 = vpack.c.b16 %v225, %v224
    %v241 = vpack.c.b16 %v227, %v226
    %v242 = vpack.c.b16 %v229, %v228
    %v243 = vpack.c.b16 %v231, %v230
    %v244 = vpack.c.b16 %v233, %v232
    %v245 = vpack.c.b16 %v235, %v234
    %v246 = vpack.c.b16 %v237, %v236
    %v247 = vpack.c.b16 %v239, %v238
    %256 = vmatpush.bf16.msra.mxu0 %v247
    %257 = vmatpush.bf16.msra.mxu0 %v246
    %258 = vmatpush.bf16.msra.mxu0 %v245
    %259 = vmatpush.bf16.msra.mxu0 %v244
    %260 = vmatpush.bf16.msra.mxu0 %v243
    %261 = vmatpush.bf16.msra.mxu0 %v242
    %262 = vmatpush.bf16.msra.mxu0 %v241
    %263 = vmatpush.bf16.msra.mxu0 %v240
    %264 = vmatmul.bf16.gmra.mxu0 %v187
    %v265 = vpop.f32.mrf.mxu0
    %v266 = vadd.f32 %v206, %v265
    %v267 = vpop.f32.mrf.mxu0
    %v268 = vadd.f32 %v206, %v267
    %269 = vdwg.mxu0
    %v270 = vpack.c.bf16 %v266, %v266
    %v271 = vpack.c.bf16 %v268, %v268
    %272 = vst [vmem:[%s7] sm:$0xf] %v270
    %273 = vst [vmem:[%s7 + $0x4] sm:$0xf] %v271
    // Predicated region
    $region38: #{_forward.1} parent=1 // pred_check
      _
    $region39: #{_forward.1} parent=1 // pred_check_branch
      %275 = sbr.rel (0) target = $region41
    $region40: #{_forward.1} parent=1 // pred_region
      _
    $region41: #{_forward.1} parent=1 // pred_fallthru
      _
    // Predicated region
    $region42: #{_forward.1} parent=1 // pred_check
      _
    $region43: #{_forward.1} parent=1 // pred_check_branch
      %277 = sbr.rel (0) target = $region45
    $region44: #{_forward.1} parent=1 // pred_region
      _
    $region45: #{_forward.1} parent=1 // pred_fallthru
      _
    %278 = vsyncpa [#allocation3], 1
    %279 = vsyncpa [#allocation5], 1

</llo_original>
